<compile_context>
chip_gen: v5e
topology: v5e:2x2
jax: 0.10.0
libtpu: 0.0.40
codegen_flags: <defaults>
</compile_context>

<pallas_src>
import functools

import jax
import jax.numpy as jnp
from jax.experimental import pallas as pl
from jax.experimental.pallas import tpu as pltpu

BN_EPS = 1e-5  # PyTorch BatchNorm2d default eps


def _round_up(x, m):
    return (x + m - 1) // m * m


def _stats_kernel(x_ref, w_ref, sum_ref, sq_ref):
    # x_ref: (TILE_R, 9*Cin) bf16   w_ref: (9*Cin, 4*Cout_pad) bf16
    # sum_ref / sq_ref: (1, 4*Cout_pad) f32 resident accumulators (constant index_map)
    t = pl.program_id(0)

    @pl.when(t == 0)
    def _():
        sum_ref[...] = jnp.zeros_like(sum_ref)
        sq_ref[...] = jnp.zeros_like(sq_ref)

    y = jnp.dot(x_ref[...], w_ref[...], preferred_element_type=jnp.float32)
    sum_ref[...] += jnp.sum(y, axis=0, keepdims=True)
    sq_ref[...] += jnp.sum(y * y, axis=0, keepdims=True)


def _apply_kernel(x_ref, w_ref, scale_ref, shift_ref, o_ref):
    # Recompute the conv tile, apply folded BN scale/shift + ReLU, lane-dense store.
    y = jnp.dot(x_ref[...], w_ref[...], preferred_element_type=jnp.float32)
    o_ref[...] = jnp.maximum(y * scale_ref[...] + shift_ref[...], 0.0).astype(o_ref.dtype)


@functools.partial(jax.jit, static_argnames=("tile_r",))
def up_conv_forward(x_nchw, w, b, gamma, beta, *, tile_r=256):
    """x_nchw: (N, Cin, H, W); w: (Cout, Cin, 3, 3) OIHW; returns (N, Cout, 2H, 2W)."""
    del b  # conv bias cancels exactly against the train-mode BN batch mean
    N, Cin, H, W = x_nchw.shape
    Cout = w.shape[0]
    H2, W2 = 2 * H, 2 * W

    Cout_pad = _round_up(Cout, 32)   # 4 * Cout_pad is a multiple of 128 -> lane-dense stores
    C4 = 4 * Cout_pad
    K = 9 * Cin
    R = N * H * W

    # Clamp the row tile to the actual problem size (multiple of 8 for sublane alignment).
    tile_r = _round_up(max(8, min(tile_r, _round_up(R, 8))), 8)
    R_pad = _round_up(R, tile_r)
    T = R_pad // tile_r

    # ---- phase-collapsed weights --------------------------------------------------
    # PyTorch (Cout, Cin, kh, kw) -> (kh, kw, Cin, Cout)
    w_hwio = jnp.transpose(w, (2, 3, 1, 0)).astype(jnp.float32)
    # M[p, A, kh] = 1 iff conv tap kh of output phase p reads original-resolution window
    # row A (A in {0,1,2} <-> original rows i-1, i, i+1).  Same matrix for columns.
    M = jnp.array([[[1, 0, 0], [0, 1, 1], [0, 0, 0]],
                   [[0, 0, 0], [1, 1, 0], [0, 0, 1]]], dtype=jnp.float32)
    w9 = jnp.einsum("pak,qbl,klio->pqabio", M, M, w_hwio)        # (2,2,3,3,Cin,Cout)
    w9 = jnp.pad(w9, ((0, 0),) * 5 + ((0, Cout_pad - Cout),))    # pad co -> Cout_pad
    # rows = (A, B, ci), cols = (py, px, co)
    w_cat = jnp.transpose(w9, (2, 3, 4, 0, 1, 5)).reshape(K, C4).astype(jnp.bfloat16)

    # ---- im2col at ORIGINAL resolution (shared by all 4 phases) --------------------
    x_nhwc = jnp.transpose(x_nchw, (0, 2, 3, 1)).astype(jnp.float32)
    xo = jnp.pad(x_nhwc, ((0, 0), (1, 1), (1, 1), (0, 0)))
    patches = [xo[:, A:A + H, B:B + W, :] for A in range(3) for B in range(3)]
    x_col = jnp.concatenate(patches, axis=-1).reshape(R, K).astype(jnp.bfloat16)
    if R_pad != R:
        # zero rows contribute 0 to sum / sumsq and are sliced away from the output
        x_col = jnp.pad(x_col, ((0, R_pad - R), (0, 0)))

    x_spec = pl.BlockSpec((tile_r, K), lambda t: (t, 0))
    w_spec = pl.BlockSpec((K, C4), lambda t: (0, 0))       # resident, DMA'd once per pass
    vec_spec = pl.BlockSpec((1, C4), lambda t: (0, 0))     # resident small vectors

    matmul_flops = 2 * R_pad * K * C4
    lhs_bytes = R_pad * K * 2
    w_bytes = K * C4 * 2

    # ---- pass 1: per-column batch statistics (sum, sum of squares) -----------------
    col_sum, col_sq = pl.pallas_call(
        _stats_kernel,
        grid=(T,),
        in_specs=[x_spec, w_spec],
        out_specs=[vec_spec, vec_spec],
        out_shape=[jax.ShapeDtypeStruct((1, C4), jnp.float32),
                   jax.ShapeDtypeStruct((1, C4), jnp.float32)],
        compiler_params=pltpu.CompilerParams(
            dimension_semantics=("arbitrary",),            # reduction over row tiles
            vmem_limit_bytes=32 * 1024 * 1024),
        cost_estimate=pl.CostEstimate(
            flops=matmul_flops + 3 * R_pad * C4,
            transcendentals=0,
            bytes_accessed=lhs_bytes + w_bytes + 2 * C4 * 4),
    )(x_col, w_cat)

    # Combine the 4 phase column-groups into per-output-channel train-mode BN stats,
    # then fold gamma/beta (and the cancelled bias) into one scale/shift per channel.
    count = jnp.float32(N * H2 * W2)                       # true element count (no padding)
    ch_sum = col_sum.reshape(4, Cout_pad).sum(axis=0)
    ch_sq = col_sq.reshape(4, Cout_pad).sum(axis=0)
    mean = ch_sum / count
    var = jnp.maximum(ch_sq / count - mean * mean, 0.0)    # biased variance (BN train mode)
    gamma_p = jnp.pad(gamma.astype(jnp.float32), (0, Cout_pad - Cout))
    beta_p = jnp.pad(beta.astype(jnp.float32), (0, Cout_pad - Cout))
    scale = gamma_p * jax.lax.rsqrt(var + BN_EPS)
    shift = beta_p - mean * scale
    scale_cols = jnp.tile(scale, 4).reshape(1, C4)
    shift_cols = jnp.tile(shift, 4).reshape(1, C4)

    # ---- pass 2: recompute matmul per tile, apply scale/shift + ReLU ---------------
    y = pl.pallas_call(
        _apply_kernel,
        grid=(T,),
        in_specs=[x_spec, w_spec, vec_spec, vec_spec],
        out_specs=pl.BlockSpec((tile_r, C4), lambda t: (t, 0)),
        out_shape=jax.ShapeDtypeStruct((R_pad, C4), jnp.float32),
        compiler_params=pltpu.CompilerParams(
            dimension_semantics=("parallel",),             # independent row tiles (megacore)
            vmem_limit_bytes=32 * 1024 * 1024),
        cost_estimate=pl.CostEstimate(
            flops=matmul_flops + 2 * R_pad * C4,
            transcendentals=0,
            bytes_accessed=lhs_bytes + w_bytes + 2 * C4 * 4 + R_pad * C4 * 4),
    )(x_col, w_cat, scale_cols, shift_cols)

    # (n, i, j, py, px, co) -> (n, co, 2i+py, 2j+px)
    y = y[:R].reshape(N, H, W, 2, 2, Cout_pad)[..., :Cout]
    return jnp.transpose(y, (0, 5, 1, 3, 2, 4)).reshape(N, Cout, H2, W2)


def up_conv_reference(x, w, b, gamma, beta):
    """Pure-JAX reference of the PyTorch forward (train-mode BN) in NCHW."""
    x_up = jnp.repeat(jnp.repeat(x, 2, axis=2), 2, axis=3)
    y = jax.lax.conv_general_dilated(
        x_up, w, window_strides=(1, 1), padding=((1, 1), (1, 1)),
        dimension_numbers=("NCHW", "OIHW", "NCHW"))
    y = y + b.reshape(1, -1, 1, 1)
    mean = jnp.mean(y, axis=(0, 2, 3), keepdims=True)
    var = jnp.mean(jnp.square(y - mean), axis=(0, 2, 3), keepdims=True)
    yhat = (y - mean) * jax.lax.rsqrt(var + BN_EPS)
    out = yhat * gamma.reshape(1, -1, 1, 1) + beta.reshape(1, -1, 1, 1)
    return jnp.maximum(out, 0.0)


if __name__ == "__main__":
    N, Cin, Cout, H, W = 2, 4, 8, 16, 16

    key = jax.random.PRNGKey(0)
    kx, kw, kb, kg, kbeta = jax.random.split(key, 5)
    x = jax.random.normal(kx, (N, Cin, H, W), dtype=jnp.float32)
    w = 0.1 * jax.random.normal(kw, (Cout, Cin, 3, 3), dtype=jnp.float32)
    b = 0.1 * jax.random.normal(kb, (Cout,), dtype=jnp.float32)
    gamma = 1.0 + 0.1 * jax.random.normal(kg, (Cout,), dtype=jnp.float32)
    beta = 0.1 * jax.random.normal(kbeta, (Cout,), dtype=jnp.float32)

    out = up_conv_forward(x, w, b, gamma, beta, tile_r=256)   # R = 512 -> 2 row tiles
    jax.block_until_ready(out)

    ref = up_conv_reference(x, w, b, gamma, beta)
    assert out.shape == (N, Cout, 2 * H, 2 * W), out.shape
    # bf16 matmul inputs (f32 accumulate) -> slightly looser tolerance than pure f32
    err = float(jnp.max(jnp.abs(out - ref)))
    assert jnp.allclose(out, ref, rtol=2e-2, atol=2e-2), err

    print("KERNEL_OK")
</pallas_src>

<mosaic_0001>
module attributes {stable_mosaic.version = 11 : i64} {
  func.func @_stats_kernel(%arg0: i32, %arg1: memref<256x36xbf16, #tpu.memory_space<vmem>>, %arg2: memref<36x128xbf16, #tpu.memory_space<vmem>>, %arg3: memref<1x128xf32, #tpu.memory_space<vmem>>, %arg4: memref<1x128xf32, #tpu.memory_space<vmem>>) attributes {dimension_semantics = [#tpu.dimension_semantics<arbitrary>], iteration_bounds = array<i64: 2>, scalar_prefetch = 0 : i64, scratch_operands = 0 : i64, tpu.core_type = #tpu.core_type<tc>, window_params = [{transform_indices = @transform_0, window_bounds = array<i64: 256, 36>}, {pipeline_mode = #tpu.pipeline_mode<synchronous>, transform_indices = @transform_1, window_bounds = array<i64: 36, 128>}, {pipeline_mode = #tpu.pipeline_mode<synchronous>, transform_indices = @transform_2, window_bounds = array<i64: 1, 128>}, {pipeline_mode = #tpu.pipeline_mode<synchronous>, transform_indices = @transform_3, window_bounds = array<i64: 1, 128>}]} {
    %c0_i32 = arith.constant 0 : i32
    %0 = arith.cmpi eq, %arg0, %c0_i32 : i32
    %1 = arith.extui %0 : i1 to i32
    %c0_i32_0 = arith.constant 0 : i32
    %2 = arith.cmpi ne, %1, %c0_i32_0 : i32
    scf.if %2 {
      %cst_14 = arith.constant 0.000000e+00 : f32
      %17 = vector.broadcast %cst_14 : f32 to vector<1x128xf32>
      %c0_15 = arith.constant 0 : index
      %c0_16 = arith.constant 0 : index
      %18 = vector.load %arg3[%c0_15, %c0_16] : memref<1x128xf32, #tpu.memory_space<vmem>>, vector<1x128xf32>
      tpu.vector_store %arg3[%c0_15, %c0_16], %17 {strides = array<i32>} : memref<1x128xf32, #tpu.memory_space<vmem>>, vector<1x128xf32>,
      %cst_17 = arith.constant 0.000000e+00 : f32
      %19 = vector.broadcast %cst_17 : f32 to vector<1x128xf32>
      %c0_18 = arith.constant 0 : index
      %c0_19 = arith.constant 0 : index
      %20 = vector.load %arg4[%c0_18, %c0_19] : memref<1x128xf32, #tpu.memory_space<vmem>>, vector<1x128xf32>
      tpu.vector_store %arg4[%c0_18, %c0_19], %19 {strides = array<i32>} : memref<1x128xf32, #tpu.memory_space<vmem>>, vector<1x128xf32>,
    } else {
    }
    %c0 = arith.constant 0 : index
    %c0_1 = arith.constant 0 : index
    %3 = vector.load %arg1[%c0, %c0_1] : memref<256x36xbf16, #tpu.memory_space<vmem>>, vector<256x36xbf16>
    %c0_2 = arith.constant 0 : index
    %c0_3 = arith.constant 0 : index
    %4 = vector.load %arg2[%c0_2, %c0_3] : memref<36x128xbf16, #tpu.memory_space<vmem>>, vector<36x128xbf16>
    %cst = arith.constant dense<0.000000e+00> : vector<256x128xf32>
    %5 = tpu.matmul %3, %4, %cst {dimension_numbers = #tpu.dot_dimension_numbers<[1], [0], [0], [1], [0, 0, 1, 1], [], []>} : vector<256x36xbf16>, vector<36x128xbf16>, vector<256x128xf32> -> vector<256x128xf32>
    %c0_4 = arith.constant 0 : index
    %c0_5 = arith.constant 0 : index
    %6 = vector.load %arg3[%c0_4, %c0_5] : memref<1x128xf32, #tpu.memory_space<vmem>>, vector<1x128xf32>
    %cst_6 = arith.constant dense<0.000000e+00> : vector<128xf32>
    %7 = vector.multi_reduction <add>, %5, %cst_6 [0] : vector<256x128xf32> to vector<128xf32>
    %8 = vector.shape_cast %7 : vector<128xf32> to vector<1x128xf32>
    %9 = arith.addf %6, %8 : vector<1x128xf32>
    %c0_7 = arith.constant 0 : index
    %c0_8 = arith.constant 0 : index
    %10 = vector.load %arg3[%c0_7, %c0_8] : memref<1x128xf32, #tpu.memory_space<vmem>>, vector<1x128xf32>
    tpu.vector_store %arg3[%c0_7, %c0_8], %9 {strides = array<i32>} : memref<1x128xf32, #tpu.memory_space<vmem>>, vector<1x128xf32>,
    %c0_9 = arith.constant 0 : index
    %c0_10 = arith.constant 0 : index
    %11 = vector.load %arg4[%c0_9, %c0_10] : memref<1x128xf32, #tpu.memory_space<vmem>>, vector<1x128xf32>
    %12 = arith.mulf %5, %5 : vector<256x128xf32>
    %cst_11 = arith.constant dense<0.000000e+00> : vector<128xf32>
    %13 = vector.multi_reduction <add>, %12, %cst_11 [0] : vector<256x128xf32> to vector<128xf32>
    %14 = vector.shape_cast %13 : vector<128xf32> to vector<1x128xf32>
    %15 = arith.addf %11, %14 : vector<1x128xf32>
    %c0_12 = arith.constant 0 : index
    %c0_13 = arith.constant 0 : index
    %16 = vector.load %arg4[%c0_12, %c0_13] : memref<1x128xf32, #tpu.memory_space<vmem>>, vector<1x128xf32>
    tpu.vector_store %arg4[%c0_12, %c0_13], %15 {strides = array<i32>} : memref<1x128xf32, #tpu.memory_space<vmem>>, vector<1x128xf32>,
    return
  }
  func.func @transform_0(%arg0: i32) -> (i32, i32) {
    %c0_i32 = arith.constant 0 : i32
    %c0_i32_0 = arith.constant 0 : i32
    return %arg0, %c0_i32 : i32, i32
  }
  func.func @transform_1(%arg0: i32) -> (i32, i32) {
    %c0_i32 = arith.constant 0 : i32
    %c0_i32_0 = arith.constant 0 : i32
    %c0_i32_1 = arith.constant 0 : i32
    return %c0_i32, %c0_i32_0 : i32, i32
  }
  func.func @transform_2(%arg0: i32) -> (i32, i32) {
    %c0_i32 = arith.constant 0 : i32
    %c0_i32_0 = arith.constant 0 : i32
    %c0_i32_1 = arith.constant 0 : i32
    return %c0_i32, %c0_i32_0 : i32, i32
  }
  func.func @transform_3(%arg0: i32) -> (i32, i32) {
    %c0_i32 = arith.constant 0 : i32
    %c0_i32_0 = arith.constant 0 : i32
    %c0_i32_1 = arith.constant 0 : i32
    return %c0_i32, %c0_i32_0 : i32, i32
  }
}

module attributes {stable_mosaic.version = 11 : i64} {
  func.func @_apply_kernel(%arg0: i32, %arg1: memref<256x36xbf16, #tpu.memory_space<vmem>>, %arg2: memref<36x128xbf16, #tpu.memory_space<vmem>>, %arg3: memref<1x128xf32, #tpu.memory_space<vmem>>, %arg4: memref<1x128xf32, #tpu.memory_space<vmem>>, %arg5: memref<256x128xf32, #tpu.memory_space<vmem>>) attributes {dimension_semantics = [#tpu.dimension_semantics<parallel>], iteration_bounds = array<i64: 2>, scalar_prefetch = 0 : i64, scratch_operands = 0 : i64, tpu.core_type = #tpu.core_type<tc>, window_params = [{transform_indices = @transform_0, window_bounds = array<i64: 256, 36>}, {pipeline_mode = #tpu.pipeline_mode<synchronous>, transform_indices = @transform_1, window_bounds = array<i64: 36, 128>}, {pipeline_mode = #tpu.pipeline_mode<synchronous>, transform_indices = @transform_2, window_bounds = array<i64: 1, 128>}, {pipeline_mode = #tpu.pipeline_mode<synchronous>, transform_indices = @transform_3, window_bounds = array<i64: 1, 128>}, {transform_indices = @transform_4, window_bounds = array<i64: 256, 128>}]} {
    %c0 = arith.constant 0 : index
    %c0_0 = arith.constant 0 : index
    %0 = vector.load %arg1[%c0, %c0_0] : memref<256x36xbf16, #tpu.memory_space<vmem>>, vector<256x36xbf16>
    %c0_1 = arith.constant 0 : index
    %c0_2 = arith.constant 0 : index
    %1 = vector.load %arg2[%c0_1, %c0_2] : memref<36x128xbf16, #tpu.memory_space<vmem>>, vector<36x128xbf16>
    %cst = arith.constant dense<0.000000e+00> : vector<256x128xf32>
    %2 = tpu.matmul %0, %1, %cst {dimension_numbers = #tpu.dot_dimension_numbers<[1], [0], [0], [1], [0, 0, 1, 1], [], []>} : vector<256x36xbf16>, vector<36x128xbf16>, vector<256x128xf32> -> vector<256x128xf32>
    %c0_3 = arith.constant 0 : index
    %c0_4 = arith.constant 0 : index
    %3 = vector.load %arg3[%c0_3, %c0_4] : memref<1x128xf32, #tpu.memory_space<vmem>>, vector<1x128xf32>
    %4 = vector.broadcast %3 : vector<1x128xf32> to vector<256x128xf32>
    %5 = arith.mulf %2, %4 : vector<256x128xf32>
    %c0_5 = arith.constant 0 : index
    %c0_6 = arith.constant 0 : index
    %6 = vector.load %arg4[%c0_5, %c0_6] : memref<1x128xf32, #tpu.memory_space<vmem>>, vector<1x128xf32>
    %7 = vector.broadcast %6 : vector<1x128xf32> to vector<256x128xf32>
    %8 = arith.addf %5, %7 : vector<256x128xf32>
    %cst_7 = arith.constant 0.000000e+00 : f32
    %9 = vector.broadcast %cst_7 : f32 to vector<256x128xf32>
    %10 = arith.maximumf %8, %9 : vector<256x128xf32>
    %c0_8 = arith.constant 0 : index
    %c0_9 = arith.constant 0 : index
    %11 = vector.load %arg5[%c0_8, %c0_9] : memref<256x128xf32, #tpu.memory_space<vmem>>, vector<256x128xf32>
    tpu.vector_store %arg5[%c0_8, %c0_9], %10 {strides = array<i32>} : memref<256x128xf32, #tpu.memory_space<vmem>>, vector<256x128xf32>,
    return
  }
  func.func @transform_0(%arg0: i32) -> (i32, i32) {
    %c0_i32 = arith.constant 0 : i32
    %c0_i32_0 = arith.constant 0 : i32
    return %arg0, %c0_i32 : i32, i32
  }
  func.func @transform_1(%arg0: i32) -> (i32, i32) {
    %c0_i32 = arith.constant 0 : i32
    %c0_i32_0 = arith.constant 0 : i32
    %c0_i32_1 = arith.constant 0 : i32
    return %c0_i32, %c0_i32_0 : i32, i32
  }
  func.func @transform_2(%arg0: i32) -> (i32, i32) {
    %c0_i32 = arith.constant 0 : i32
    %c0_i32_0 = arith.constant 0 : i32
    %c0_i32_1 = arith.constant 0 : i32
    return %c0_i32, %c0_i32_0 : i32, i32
  }
  func.func @transform_3(%arg0: i32) -> (i32, i32) {
    %c0_i32 = arith.constant 0 : i32
    %c0_i32_0 = arith.constant 0 : i32
    %c0_i32_1 = arith.constant 0 : i32
    return %c0_i32, %c0_i32_0 : i32, i32
  }
  func.func @transform_4(%arg0: i32) -> (i32, i32) {
    %c0_i32 = arith.constant 0 : i32
    %c0_i32_0 = arith.constant 0 : i32
    return %arg0, %c0_i32 : i32, i32
  }
}

</mosaic_0001>

<llo_original>
// kernel: tile.18
$region0: #{tile.18}
  #allocation0 [shape = 's32[1]{0}', space=sflag, size = 0x4, scoped, tag = 'scoped memory for tile.18']
  %s0 = inlined_call_operand.vmem [shape: f32[32], index: 0, kind: input, shape index: {}]
  %s1 = inlined_call_operand.vmem [shape: f32[4,32], index: 1, kind: output, shape index: {}]
  // Predicated region
  $region2: #{tile.18} parent=0 // pred_check
    _
  $region3: #{tile.18} parent=0 // pred_check_branch
    %3 = sbr.rel (0) target = $region5
  $region4: #{tile.18} parent=0 // pred_region
    _
  $region5: #{tile.18} parent=0 // pred_fallthru
    _
  %v4 = vld [vmem:[%s0] ss:$0 sm:$0xff]
  %5 = vst [vmem:[%s1] sm:$0xf] %v4

// kernel: tile.19
$region0: #{tile.19}
  %s0 = inlined_call_operand.vmem [shape: f32[4,32], index: 0, kind: input, shape index: {}]
  %s1 = inlined_call_operand.vmem [shape: f32[1,128], index: 1, kind: output, shape index: {}]
  $region1: #{tile.19} parent=0
    #allocation0 [shape = 'u8[4096]{0}', space=vmem, size = 0x1000, scoped, tag = 'scoped mem for output reshape']
    #allocation1 [shape = 'u8[4096]{0}', space=vmem, size = 0x1000, scoped, tag = 'scoped mem for input reshape']
    %s3 = ssub.s32 16, 1
    %v4 = vld [vmem:[%s0] sm:%s3]
    %5 = vst [vmem:[#allocation1] sm:%s3] %v4
    %v6 = vld [vmem:[#allocation1] sm:$0x1]
    %vm7 = vcmask 261120
    %8 = vst.msk [vmem:[#allocation0] sm:$0x1] %vm7, %v6
    %s9 = scalar_lea.vmem [#allocation1], 3
    %v10 = vld [vmem:[%s9] sm:$0x1]
    %11 = vrot.lane.b32.xlu0 %v10, 96
    %v12 = vpop.permute.xlu0 %11
    %vm13 = vcmask 1048320
    %14 = vst.msk [vmem:[#allocation0] sm:$0x1] %vm13, %v12
    %s15 = scalar_lea.vmem [#allocation1], 2
    %v16 = vld [vmem:[%s15] sm:$0x1]
    %17 = vrot.lane.b32.xlu0 %v16, 64
    %v18 = vpop.permute.xlu0 %17
    %vm19 = vcmask 785920
    %20 = vst.msk [vmem:[#allocation0] sm:$0x1] %vm19, %v18
    %s21 = scalar_lea.vmem [#allocation1], 1
    %v22 = vld [vmem:[%s21] sm:$0x1]
    %23 = vrot.lane.b32.xlu0 %v22, 32
    %v24 = vpop.permute.xlu0 %23
    %vm25 = vcmask 523520
    %26 = vst.msk [vmem:[#allocation0] sm:$0x1] %vm25, %v24
    %s28 = ssub.s32 2, 1
    %v29 = vld [vmem:[#allocation0] sm:%s28]
    %s31 = ssub.s32 2, 1
    %32 = vst [vmem:[%s1] sm:%s31] %v29

// kernel: up_conv_forward.2
$region0: #{up_conv_forward.2}
  #allocation0 [shape = 'u32[]', space=smem, size = 0x4, offset = 0x4, fixed_abs, tag = 'smem constant byte address 0x4 - core index']
  #allocation1 [shape = 'u32[72,128]{1,0:T(1,128)}', space=vmem, size = 0x9000, scoped, tag = 'internal scratch']
  %s0 = inlined_call_operand.vmem [shape: bf16[512,36], index: 0, kind: input, shape index: {}]
  %s1 = inlined_call_operand.vmem [shape: bf16[36,128], index: 1, kind: input, shape index: {}]
  %s2 = inlined_call_operand.vmem [shape: f32[1,128], index: 2, kind: output, shape index: {0}]
  %s3 = inlined_call_operand.vmem [shape: f32[1,128], index: 3, kind: output, shape index: {1}]
  %4 = xla_tuple %s2, %s3
  %s5 = sld [smem:[#allocation0]]
  $region53: #{up_conv_forward.2} parent=0
    _
  %s7 = ssub.s32 1, %s5
  %s8 = scalar_select 0, %s7, %s5
  loop: start=0, step=1, limit=4
  $region2: #{up_conv_forward.2} parent=0 // loop_pre_header
    _
  $region3: #{up_conv_forward.2} parent=0 // loop_header
    %s10 = sphi 0, %s14
    %p11 = scmp.ge.s32.totalorder %s10, 4
    %s20 = sphi 0, %s22
    %s23 = sphi 0, %s20
    %s24 = sphi 0, %s23
    %s40 = sphi 0, %s24
    %s44 = sphi 0, %s44
    %s46 = sphi 0, %s44
    %s47 = sphi 0, %s46
    %s61 = sphi 0, %s47
    %s65 = sphi 0, %s65
    %s67 = sphi 0, %s65
    %s68 = sphi 0, %s67
    %s82 = sphi 0, %s68
    %s86 = sphi 0, %s86
    %s88 = sphi 0, %s86
    %s89 = sphi 0, %s88
    %s103 = sphi 0, %s89
  $region4: #{up_conv_forward.2} parent=0 // loop_header_branch
    %13 = sbr.rel (%p11) target = $region8
  $region5: #{up_conv_forward.2} parent=0 // loop_body
    %s15 = ssub.s32 %s10, 1
    %s16 = ssub.s32 %s10, 2
    %s17 = sadd.s32 %s10, 1
    %s18 = ssub.s32 %s10, %s17
    %p19 = scmp.eq.s32.totalorder %s18, 0
    %s21 = sadd.s32 %s20, 1
    %s22 = scalar_select %p19, %s20, %s21
    %p25 = pneg %p19
    %p26 = scmp.eq.s32.totalorder %s10, 1
    %p27 = por %p25, %p26
    %p28 = scmp.ne.s32.totalorder %s20, %s23
    %p29 = scmp.eq.s32.totalorder %s10, 0
    %p30 = por %p28, %p29
    %p31 = scmp.ne.s32.totalorder %s20, %s23
    %p32 = scmp.eq.s32.totalorder %s15, 1
    %p33 = por %p31, %p32
    %p34 = scmp.ne.s32.totalorder %s23, %s24
    %p35 = scmp.eq.s32.totalorder %s15, 0
    %p36 = por %p34, %p35
    %p37 = scmp.ne.s32.totalorder %s23, %s24
    %p38 = scmp.eq.s32.totalorder %s16, 1
    %p39 = por %p37, %p38
    %p41 = scmp.ne.s32.totalorder %s24, %s40
    %p42 = scmp.eq.s32.totalorder %s16, 0
    %p43 = por %p41, %p42
    %s45 = sadd.s32 %s44, 1
    %p48 = scmp.eq.s32.totalorder %s10, 1
    %p49 = scmp.ne.s32.totalorder %s44, %s46
    %p50 = scmp.eq.s32.totalorder %s10, 0
    %p51 = por %p49, %p50
    %p52 = scmp.ne.s32.totalorder %s44, %s46
    %p53 = scmp.eq.s32.totalorder %s15, 1
    %p54 = por %p52, %p53
    %p55 = scmp.ne.s32.totalorder %s46, %s47
    %p56 = scmp.eq.s32.totalorder %s15, 0
    %p57 = por %p55, %p56
    %p58 = scmp.ne.s32.totalorder %s46, %s47
    %p59 = scmp.eq.s32.totalorder %s16, 1
    %p60 = por %p58, %p59
    %p62 = scmp.ne.s32.totalorder %s47, %s61
    %p63 = scmp.eq.s32.totalorder %s16, 0
    %p64 = por %p62, %p63
    %s66 = sadd.s32 %s65, 1
    %p69 = scmp.eq.s32.totalorder %s10, 1
    %p70 = scmp.ne.s32.totalorder %s65, %s67
    %p71 = scmp.eq.s32.totalorder %s10, 0
    %p72 = por %p70, %p71
    %p73 = scmp.ne.s32.totalorder %s65, %s67
    %p74 = scmp.eq.s32.totalorder %s15, 1
    %p75 = por %p73, %p74
    %p76 = scmp.ne.s32.totalorder %s67, %s68
    %p77 = scmp.eq.s32.totalorder %s15, 0
    %p78 = por %p76, %p77
    %p79 = scmp.ne.s32.totalorder %s67, %s68
    %p80 = scmp.eq.s32.totalorder %s16, 1
    %p81 = por %p79, %p80
    %p83 = scmp.ne.s32.totalorder %s68, %s82
    %p84 = scmp.eq.s32.totalorder %s16, 0
    %p85 = por %p83, %p84
    %s87 = sadd.s32 %s86, 1
    %p90 = scmp.eq.s32.totalorder %s10, 1
    %p91 = scmp.ne.s32.totalorder %s86, %s88
    %p92 = scmp.eq.s32.totalorder %s10, 0
    %p93 = por %p91, %p92
    %p94 = scmp.ne.s32.totalorder %s86, %s88
    %p95 = scmp.eq.s32.totalorder %s15, 1
    %p96 = por %p94, %p95
    %p97 = scmp.ne.s32.totalorder %s88, %s89
    %p98 = scmp.eq.s32.totalorder %s15, 0
    %p99 = por %p97, %p98
    %p100 = scmp.ne.s32.totalorder %s88, %s89
    %p101 = scmp.eq.s32.totalorder %s16, 1
    %p102 = por %p100, %p101
    %p104 = scmp.ne.s32.totalorder %s89, %s103
    %p105 = scmp.eq.s32.totalorder %s16, 0
    %p106 = por %p104, %p105
    %p107 = scmp.le.s32.totalorder 1, %s10
    %p108 = scmp.lt.s32.totalorder %s10, 3
    %p109 = pnand %p107, %p108
    %p110 = pneg %p109
    // Predicated region
    $region9: #{up_conv_forward.2} parent=5 // pred_check
      _
    $region10: #{up_conv_forward.2} parent=5 // pred_check_branch
      %112 = sbr.rel (%p109) target = $region12
    $region11: #{up_conv_forward.2} parent=5 // pred_region
      %s113 = ssub.s32 %s10, 1
      // Predicated region
      $region13: #{up_conv_forward.2} parent=11 // pred_check
        %p114 = pneg %p57
      $region14: #{up_conv_forward.2} parent=11 // pred_check_branch
        %116 = sbr.rel (%p114) target = $region16
      $region15: #{up_conv_forward.2} parent=11 // pred_region
        _
      $region16: #{up_conv_forward.2} parent=11 // pred_fallthru
        _
    $region12: #{up_conv_forward.2} parent=5 // pred_fallthru
      _
    %p117 = scmp.lt.s32.totalorder %s10, 2
    // Predicated region
    $region17: #{up_conv_forward.2} parent=5 // pred_check
      %p118 = pneg %p117
    $region18: #{up_conv_forward.2} parent=5 // pred_check_branch
      %120 = sbr.rel (%p118) target = $region20
    $region19: #{up_conv_forward.2} parent=5 // pred_region
      // Predicated region
      $region21: #{up_conv_forward.2} parent=19 // pred_check
        %p121 = pneg %p30
      $region22: #{up_conv_forward.2} parent=19 // pred_check_branch
        %123 = sbr.rel (%p121) target = $region24
      $region23: #{up_conv_forward.2} parent=19 // pred_region
        %s124 = smul.u32 32, %s10
        %p125 = scmp.lt.s32.totalorder %s124, 63
        %s126 = scalar_select %p125, %s124, 63
        %s127 = smul.addr %s126, 4
        %s128 = scalar_lea.vmem %s0, %s127
        %s129 = smul.u32 32, %s10
      $region24: #{up_conv_forward.2} parent=19 // pred_fallthru
        _
    $region20: #{up_conv_forward.2} parent=5 // pred_fallthru
      _
    %p130 = scmp.le.s32.totalorder 1, %s10
    %p131 = scmp.lt.s32.totalorder %s10, 3
    %p132 = pnand %p130, %p131
    %p133 = pneg %p132
    // Predicated region
    $region25: #{up_conv_forward.2} parent=5 // pred_check
      _
    $region26: #{up_conv_forward.2} parent=5 // pred_check_branch
      %135 = sbr.rel (%p132) target = $region28
    $region27: #{up_conv_forward.2} parent=5 // pred_region
      %s136 = ssub.s32 %s10, 1
      %s137 = smul.u32 32, %s15
      %p138 = scmp.lt.s32.totalorder %s137, 63
      %s139 = scalar_select %p138, %s137, 63
      %s140 = smul.addr %s139, 4
      %s141 = scalar_lea.vmem %s0, %s140
      %p142 = pneg %p36
      %p143 = pneg %p33
      %p144 = pneg %p57
      %p145 = pneg %p54
      %p146 = pneg %p78
      %p147 = pneg %p75
      %p148 = pneg %p99
      %p149 = pneg %p96
      %s150 = smul.u32 32, %s15
      %p151 = scmp.lt.s32.totalorder %s150, 63
      %s152 = scalar_select %p151, %s150, 63
      %s153 = smul.addr %s152, 4
      %s154 = scalar_lea.vmem %s0, %s153
      %s155 = smul.u32 32, %s15
      %p157 = scmp.eq.s32.totalorder %s15, 0
      // Predicated region
      $region29: #{up_conv_forward.2} parent=27 // pred_check
        %p158 = pneg %p157
      $region30: #{up_conv_forward.2} parent=27 // pred_check_branch
        %160 = sbr.rel (%p158) target = $region32
      $region31: #{up_conv_forward.2} parent=27 // pred_region
        %161 = vst [vmem:[%s2] sm:$0x1] 0.0
        %162 = vst [vmem:[%s3] sm:$0x1] 0.0
      $region32: #{up_conv_forward.2} parent=27 // pred_fallthru
        _
      %v163 = vld [vmem:[%s154] sm:$0xf]
      %v164 = vld [vmem:[%s154 + $0x4] sm:$0xf]
      %v165 = vld [vmem:[%s154 + $0x8] sm:$0xf]
      %v166 = vld [vmem:[%s154 + $0xc] sm:$0xf]
      %v167 = vld [vmem:[%s154 + $0x10] sm:$0xf]
      %v168 = vld [vmem:[%s154 + $0x14] sm:$0xf]
      %v169 = vld [vmem:[%s154 + $0x18] sm:$0xf]
      %v170 = vld [vmem:[%s154 + $0x1c] sm:$0xf]
      %v171 = vld [vmem:[%s154 + $0x20] sm:$0xf]
      %v172 = vld [vmem:[%s154 + $0x24] sm:$0xf]
      %v173 = vld [vmem:[%s154 + $0x28] sm:$0xf]
      %v174 = vld [vmem:[%s154 + $0x2c] sm:$0xf]
      %v175 = vld [vmem:[%s154 + $0x30] sm:$0xf]
      %v176 = vld [vmem:[%s154 + $0x34] sm:$0xf]
      %v177 = vld [vmem:[%s154 + $0x38] sm:$0xf]
      %v178 = vld [vmem:[%s154 + $0x3c] sm:$0xf]
      %v179 = vld [vmem:[%s154 + $0x40] sm:$0xf]
      %v180 = vld [vmem:[%s154 + $0x44] sm:$0xf]
      %v181 = vld [vmem:[%s154 + $0x48] sm:$0xf]
      %v182 = vld [vmem:[%s154 + $0x4c] sm:$0xf]
      %v183 = vld [vmem:[%s154 + $0x50] sm:$0xf]
      %v184 = vld [vmem:[%s154 + $0x54] sm:$0xf]
      %v185 = vld [vmem:[%s154 + $0x58] sm:$0xf]
      %v186 = vld [vmem:[%s154 + $0x5c] sm:$0xf]
      %v187 = vld [vmem:[%s154 + $0x60] sm:$0xf]
      %v188 = vld [vmem:[%s154 + $0x64] sm:$0xf]
      %v189 = vld [vmem:[%s154 + $0x68] sm:$0xf]
      %v190 = vld [vmem:[%s154 + $0x6c] sm:$0xf]
      %v191 = vld [vmem:[%s154 + $0x70] sm:$0xf]
      %v192 = vld [vmem:[%s154 + $0x74] sm:$0xf]
      %v193 = vld [vmem:[%s154 + $0x78] sm:$0xf]
      %v194 = vld [vmem:[%s154 + $0x7c] sm:$0xf]
      %v195 = vld [vmem:[%s1] sm:$0xf]
      %v196 = vld [vmem:[%s1 + $0x4] sm:$0xf]
      %v197 = vld [vmem:[%s1 + $0x8] sm:$0xf]
      %v198 = vld [vmem:[%s1 + $0xc] sm:$0xf]
      %v199 = vld [vmem:[%s1 + $0x10] sm:$0x3]
      %v232 = vunpack.c.l.b16 %v163
      %v233 = vunpack.c.l.b16 %v164
      %v234 = vunpack.c.l.b16 %v165
      %v235 = vunpack.c.l.b16 %v166
      %v236 = vunpack.c.l.b16 %v167
      %v237 = vunpack.c.l.b16 %v168
      %v238 = vunpack.c.l.b16 %v169
      %v239 = vunpack.c.l.b16 %v170
      %v240 = vunpack.c.l.b16 %v171
      %v241 = vunpack.c.l.b16 %v172
      %v242 = vunpack.c.l.b16 %v173
      %v243 = vunpack.c.l.b16 %v174
      %v244 = vunpack.c.l.b16 %v175
      %v245 = vunpack.c.l.b16 %v176
      %v246 = vunpack.c.l.b16 %v177
      %v247 = vunpack.c.l.b16 %v178
      %v248 = vunpack.c.l.b16 %v179
      %v249 = vunpack.c.l.b16 %v180
      %v250 = vunpack.c.l.b16 %v181
      %v251 = vunpack.c.l.b16 %v182
      %v252 = vunpack.c.l.b16 %v183
      %v253 = vunpack.c.l.b16 %v184
      %v254 = vunpack.c.l.b16 %v185
      %v255 = vunpack.c.l.b16 %v186
      %v256 = vunpack.c.l.b16 %v187
      %v257 = vunpack.c.l.b16 %v188
      %v258 = vunpack.c.l.b16 %v189
      %v259 = vunpack.c.l.b16 %v190
      %v260 = vunpack.c.l.b16 %v191
      %v261 = vunpack.c.l.b16 %v192
      %v262 = vunpack.c.l.b16 %v193
      %v263 = vunpack.c.l.b16 %v194
      %v264 = vpack.c.b16 %v233, %v232
      %v265 = vpack.c.b16 %v235, %v234
      %v266 = vpack.c.b16 %v237, %v236
      %v267 = vpack.c.b16 %v239, %v238
      %v268 = vpack.c.b16 %v241, %v240
      %v269 = vpack.c.b16 %v243, %v242
      %v270 = vpack.c.b16 %v245, %v244
      %v271 = vpack.c.b16 %v247, %v246
      %v272 = vpack.c.b16 %v249, %v248
      %v273 = vpack.c.b16 %v251, %v250
      %v274 = vpack.c.b16 %v253, %v252
      %v275 = vpack.c.b16 %v255, %v254
      %v276 = vpack.c.b16 %v257, %v256
      %v277 = vpack.c.b16 %v259, %v258
      %v278 = vpack.c.b16 %v261, %v260
      %v279 = vpack.c.b16 %v263, %v262
      %v285 = vunpack.c.l.b16 %v195
      %v286 = vunpack.c.l.b16 %v196
      %v287 = vunpack.c.l.b16 %v197
      %v288 = vunpack.c.l.b16 %v198
      %v289 = vunpack.c.l.b16 %v199
      %v290 = vpack.c.b16 %v286, %v285
      %v291 = vpack.c.b16 %v288, %v287
      %v292 = vpack.c.b16 %v289, %v289
      %vm295 = vcmask 293888
      %v297 = vsel %vm295, %v264, 0
      %v300 = vsel %vm295, %v265, 0
      %v303 = vsel %vm295, %v266, 0
      %v306 = vsel %vm295, %v267, 0
      %v309 = vsel %vm295, %v268, 0
      %v312 = vsel %vm295, %v269, 0
      %v315 = vsel %vm295, %v270, 0
      %v318 = vsel %vm295, %v271, 0
      %v321 = vsel %vm295, %v272, 0
      %v324 = vsel %vm295, %v273, 0
      %v327 = vsel %vm295, %v274, 0
      %v330 = vsel %vm295, %v275, 0
      %v333 = vsel %vm295, %v276, 0
      %v336 = vsel %vm295, %v277, 0
      %v339 = vsel %vm295, %v278, 0
      %v342 = vsel %vm295, %v279, 0
      %vm344 = vcmask 1041408
      %v346 = vsel %vm344, %v292, 0
      %348 = vmatpush.bf16.msra.mxu0 0
      %349 = vmatpush.bf16.msra.mxu0 0
      %350 = vmatpush.bf16.msra.mxu0 0
      %351 = vmatpush.bf16.msra.mxu0 0
      %352 = vmatpush.bf16.msra.mxu0 0
      %353 = vmatpush.bf16.msra.mxu0 %v346
      %354 = vmatpush.bf16.msra.mxu0 %v291
      %355 = vmatpush.bf16.msra.mxu0 %v290
      %356 = vmatmul.bf16.gmra.mxu0 %v297
      %v357 = vpop.f32.mrf.mxu0
      %v358 = vadd.f32 0.0, %v357
      %v359 = vpop.f32.mrf.mxu0
      %v360 = vadd.f32 0.0, %v359
      %361 = vmatmul.bf16.gmra.mxu0 %v300
      %v362 = vpop.f32.mrf.mxu0
      %v363 = vadd.f32 0.0, %v362
      %v364 = vpop.f32.mrf.mxu0
      %v365 = vadd.f32 0.0, %v364
      %366 = vmatmul.bf16.gmra.mxu0 %v303
      %v367 = vpop.f32.mrf.mxu0
      %v368 = vadd.f32 0.0, %v367
      %v369 = vpop.f32.mrf.mxu0
      %v370 = vadd.f32 0.0, %v369
      %371 = vmatmul.bf16.gmra.mxu0 %v306
      %v372 = vpop.f32.mrf.mxu0
      %v373 = vadd.f32 0.0, %v372
      %v374 = vpop.f32.mrf.mxu0
      %v375 = vadd.f32 0.0, %v374
      %376 = vmatmul.bf16.gmra.mxu0 %v309
      %v377 = vpop.f32.mrf.mxu0
      %v378 = vadd.f32 0.0, %v377
      %v379 = vpop.f32.mrf.mxu0
      %v380 = vadd.f32 0.0, %v379
      %381 = vmatmul.bf16.gmra.mxu0 %v312
      %v382 = vpop.f32.mrf.mxu0
      %v383 = vadd.f32 0.0, %v382
      %v384 = vpop.f32.mrf.mxu0
      %v385 = vadd.f32 0.0, %v384
      %386 = vmatmul.bf16.gmra.mxu0 %v315
      %v387 = vpop.f32.mrf.mxu0
      %v388 = vadd.f32 0.0, %v387
      %v389 = vpop.f32.mrf.mxu0
      %v390 = vadd.f32 0.0, %v389
      %391 = vmatmul.bf16.gmra.mxu0 %v318
      %v392 = vpop.f32.mrf.mxu0
      %v393 = vadd.f32 0.0, %v392
      %v394 = vpop.f32.mrf.mxu0
      %v395 = vadd.f32 0.0, %v394
      %396 = vmatmul.bf16.gmra.mxu0 %v321
      %v397 = vpop.f32.mrf.mxu0
      %v398 = vadd.f32 0.0, %v397
      %v399 = vpop.f32.mrf.mxu0
      %v400 = vadd.f32 0.0, %v399
      %401 = vmatmul.bf16.gmra.mxu0 %v324
      %v402 = vpop.f32.mrf.mxu0
      %v403 = vadd.f32 0.0, %v402
      %v404 = vpop.f32.mrf.mxu0
      %v405 = vadd.f32 0.0, %v404
      %406 = vmatmul.bf16.gmra.mxu0 %v327
      %v407 = vpop.f32.mrf.mxu0
      %v408 = vadd.f32 0.0, %v407
      %v409 = vpop.f32.mrf.mxu0
      %v410 = vadd.f32 0.0, %v409
      %411 = vmatmul.bf16.gmra.mxu0 %v330
      %v412 = vpop.f32.mrf.mxu0
      %v413 = vadd.f32 0.0, %v412
      %v414 = vpop.f32.mrf.mxu0
      %v415 = vadd.f32 0.0, %v414
      %416 = vmatmul.bf16.gmra.mxu0 %v333
      %v417 = vpop.f32.mrf.mxu0
      %v418 = vadd.f32 0.0, %v417
      %v419 = vpop.f32.mrf.mxu0
      %v420 = vadd.f32 0.0, %v419
      %421 = vmatmul.bf16.gmra.mxu0 %v336
      %v422 = vpop.f32.mrf.mxu0
      %v423 = vadd.f32 0.0, %v422
      %v424 = vpop.f32.mrf.mxu0
      %v425 = vadd.f32 0.0, %v424
      %426 = vmatmul.bf16.gmra.mxu0 %v339
      %v427 = vpop.f32.mrf.mxu0
      %v428 = vadd.f32 0.0, %v427
      %v429 = vpop.f32.mrf.mxu0
      %v430 = vadd.f32 0.0, %v429
      %431 = vmatmul.bf16.gmra.mxu0 %v342
      %v432 = vpop.f32.mrf.mxu0
      %v433 = vadd.f32 0.0, %v432
      %v434 = vpop.f32.mrf.mxu0
      %v435 = vadd.f32 0.0, %v434
      %436 = vdwg.mxu0
      %v437 = vld [vmem:[%s2] sm:$0x1]
      %v438 = vadd.f32 %v358, %v360
      %v439 = vadd.f32 %v438, %v363
      %v440 = vadd.f32 %v439, %v365
      %v441 = vadd.f32 %v440, %v368
      %v442 = vadd.f32 %v441, %v370
      %v443 = vadd.f32 %v442, %v373
      %v444 = vadd.f32 %v443, %v375
      %v445 = vadd.f32 %v444, %v378
      %v446 = vadd.f32 %v445, %v380
      %v447 = vadd.f32 %v446, %v383
      %v448 = vadd.f32 %v447, %v385
      %v449 = vadd.f32 %v448, %v388
      %v450 = vadd.f32 %v449, %v390
      %v451 = vadd.f32 %v450, %v393
      %v452 = vadd.f32 %v451, %v395
      %v453 = vadd.f32 %v452, %v398
      %v454 = vadd.f32 %v453, %v400
      %v455 = vadd.f32 %v454, %v403
      %v456 = vadd.f32 %v455, %v405
      %v457 = vadd.f32 %v456, %v408
      %v458 = vadd.f32 %v457, %v410
      %v459 = vadd.f32 %v458, %v413
      %v460 = vadd.f32 %v459, %v415
      %v461 = vadd.f32 %v460, %v418
      %v462 = vadd.f32 %v461, %v420
      %v463 = vadd.f32 %v462, %v423
      %v464 = vadd.f32 %v463, %v425
      %v465 = vadd.f32 %v464, %v428
      %v466 = vadd.f32 %v465, %v430
      %v467 = vadd.f32 %v466, %v433
      %v468 = vadd.f32 %v467, %v435
      %v469 = vrot.slane %v468, 4
      %v470 = vadd.f32 %v468, %v469
      %v471 = vrot.slane %v470, 2
      %v472 = vadd.f32 %v470, %v471
      %v473 = vrot.slane %v472, 1
      %v474 = vadd.f32 %v472, %v473
      %v475 = vadd.f32 %v437, %v474
      %476 = vst [vmem:[%s2] sm:$0x1] %v475
      %v477 = vld [vmem:[%s3] sm:$0x1]
      %v478 = vmul.f32 %v358, %v358
      %v479 = vmul.f32 %v360, %v360
      %v480 = vmul.f32 %v363, %v363
      %v481 = vmul.f32 %v365, %v365
      %v482 = vmul.f32 %v368, %v368
      %v483 = vmul.f32 %v370, %v370
      %v484 = vmul.f32 %v373, %v373
      %v485 = vmul.f32 %v375, %v375
      %v486 = vmul.f32 %v378, %v378
      %v487 = vmul.f32 %v380, %v380
      %v488 = vmul.f32 %v383, %v383
      %v489 = vmul.f32 %v385, %v385
      %v490 = vmul.f32 %v388, %v388
      %v491 = vmul.f32 %v390, %v390
      %v492 = vmul.f32 %v393, %v393
      %v493 = vmul.f32 %v395, %v395
      %v494 = vmul.f32 %v398, %v398
      %v495 = vmul.f32 %v400, %v400
      %v496 = vmul.f32 %v403, %v403
      %v497 = vmul.f32 %v405, %v405
      %v498 = vmul.f32 %v408, %v408
      %v499 = vmul.f32 %v410, %v410
      %v500 = vmul.f32 %v413, %v413
      %v501 = vmul.f32 %v415, %v415
      %v502 = vmul.f32 %v418, %v418
      %v503 = vmul.f32 %v420, %v420
      %v504 = vmul.f32 %v423, %v423
      %v505 = vmul.f32 %v425, %v425
      %v506 = vmul.f32 %v428, %v428
      %v507 = vmul.f32 %v430, %v430
      %v508 = vmul.f32 %v433, %v433
      %v509 = vmul.f32 %v435, %v435
      %v510 = vadd.f32 %v478, %v479
      %v511 = vadd.f32 %v510, %v480
      %v512 = vadd.f32 %v511, %v481
      %v513 = vadd.f32 %v512, %v482
      %v514 = vadd.f32 %v513, %v483
      %v515 = vadd.f32 %v514, %v484
      %v516 = vadd.f32 %v515, %v485
      %v517 = vadd.f32 %v516, %v486
      %v518 = vadd.f32 %v517, %v487
      %v519 = vadd.f32 %v518, %v488
      %v520 = vadd.f32 %v519, %v489
      %v521 = vadd.f32 %v520, %v490
      %v522 = vadd.f32 %v521, %v491
      %v523 = vadd.f32 %v522, %v492
      %v524 = vadd.f32 %v523, %v493
      %v525 = vadd.f32 %v524, %v494
      %v526 = vadd.f32 %v525, %v495
      %v527 = vadd.f32 %v526, %v496
      %v528 = vadd.f32 %v527, %v497
      %v529 = vadd.f32 %v528, %v498
      %v530 = vadd.f32 %v529, %v499
      %v531 = vadd.f32 %v530, %v500
      %v532 = vadd.f32 %v531, %v501
      %v533 = vadd.f32 %v532, %v502
      %v534 = vadd.f32 %v533, %v503
      %v535 = vadd.f32 %v534, %v504
      %v536 = vadd.f32 %v535, %v505
      %v537 = vadd.f32 %v536, %v506
      %v538 = vadd.f32 %v537, %v507
      %v539 = vadd.f32 %v538, %v508
      %v540 = vadd.f32 %v539, %v509
      %v541 = vrot.slane %v540, 4
      %v542 = vadd.f32 %v540, %v541
      %v543 = vrot.slane %v542, 2
      %v544 = vadd.f32 %v542, %v543
      %v545 = vrot.slane %v544, 1
      %v546 = vadd.f32 %v544, %v545
      %v547 = vadd.f32 %v477, %v546
      %548 = vst [vmem:[%s3] sm:$0x1] %v547
      // Predicated region
      $region33: #{up_conv_forward.2} parent=27 // pred_check
        %p549 = pneg %p75
      $region34: #{up_conv_forward.2} parent=27 // pred_check_branch
        %551 = sbr.rel (%p549) target = $region36
      $region35: #{up_conv_forward.2} parent=27 // pred_region
        _
      $region36: #{up_conv_forward.2} parent=27 // pred_fallthru
        _
      // Predicated region
      $region37: #{up_conv_forward.2} parent=27 // pred_check
        %p552 = pneg %p96
      $region38: #{up_conv_forward.2} parent=27 // pred_check_branch
        %554 = sbr.rel (%p552) target = $region40
      $region39: #{up_conv_forward.2} parent=27 // pred_region
        _
      $region40: #{up_conv_forward.2} parent=27 // pred_fallthru
        _
      // Predicated region
      $region41: #{up_conv_forward.2} parent=27 // pred_check
        %p555 = pneg %p75
      $region42: #{up_conv_forward.2} parent=27 // pred_check_branch
        %557 = sbr.rel (%p555) target = $region44
      $region43: #{up_conv_forward.2} parent=27 // pred_region
        _
      $region44: #{up_conv_forward.2} parent=27 // pred_fallthru
        _
      // Predicated region
      $region45: #{up_conv_forward.2} parent=27 // pred_check
        %p558 = pneg %p96
      $region46: #{up_conv_forward.2} parent=27 // pred_check_branch
        %560 = sbr.rel (%p558) target = $region48
      $region47: #{up_conv_forward.2} parent=27 // pred_region
        _
      $region48: #{up_conv_forward.2} parent=27 // pred_fallthru
        _
    $region28: #{up_conv_forward.2} parent=5 // pred_fallthru
      _
    %p561 = scmp.le.s32.totalorder 2, %s10
    // Predicated region
    $region49: #{up_conv_forward.2} parent=5 // pred_check
      %p562 = pneg %p561
    $region50: #{up_conv_forward.2} parent=5 // pred_check_branch
      %564 = sbr.rel (%p562) target = $region52
    $region51: #{up_conv_forward.2} parent=5 // pred_region
      %s565 = ssub.s32 %s10, 2
    $region52: #{up_conv_forward.2} parent=5 // pred_fallthru
      _
  $region6: #{up_conv_forward.2} parent=0 // loop_footer
    %s14 = sadd.s32 1, %s10
  $region7: #{up_conv_forward.2} parent=0 // loop_footer_branch
    %9 = sbr.rel target = $region3
  $region8: #{up_conv_forward.2} parent=0 // loop_exit
    _

// kernel: up_conv_forward.3
$region0: #{up_conv_forward.3}
  #allocation0 [shape = 'u32[]', space=smem, size = 0x4, offset = 0x4, fixed_abs, tag = 'smem constant byte address 0x4 - core index']
  #allocation1 [shape = 'u32[72,128]{1,0:T(1,128)}', space=vmem, size = 0x9000, scoped, tag = 'internal scratch']
  %s0 = inlined_call_operand.vmem [shape: bf16[512,36], index: 0, kind: input, shape index: {}]
  %s1 = inlined_call_operand.vmem [shape: bf16[36,128], index: 1, kind: input, shape index: {}]
  %s2 = inlined_call_operand.vmem [shape: f32[1,128], index: 2, kind: input, shape index: {}]
  %s3 = inlined_call_operand.vmem [shape: f32[1,128], index: 3, kind: input, shape index: {}]
  %s4 = inlined_call_operand.vmem [shape: f32[512,128], index: 4, kind: output, shape index: {}]
  %s5 = sld [smem:[#allocation0]]
  $region49: #{up_conv_forward.3} parent=0
    _
  %s7 = ssub.s32 1, %s5
  %s8 = scalar_select 0, %s7, %s5
  loop: start=0, step=1, limit=4
  $region2: #{up_conv_forward.3} parent=0 // loop_pre_header
    _
  $region3: #{up_conv_forward.3} parent=0 // loop_header
    %s10 = sphi 0, %s14
    %p11 = scmp.ge.s32.totalorder %s10, 4
    %s20 = sphi 0, %s22
    %s23 = sphi 0, %s20
    %s24 = sphi 0, %s23
    %s40 = sphi 0, %s24
    %s44 = sphi 0, %s44
    %s46 = sphi 0, %s44
    %s47 = sphi 0, %s46
    %s61 = sphi 0, %s47
    %s65 = sphi 0, %s65
    %s67 = sphi 0, %s65
    %s68 = sphi 0, %s67
    %s82 = sphi 0, %s68
    %s86 = sphi 0, %s86
    %s88 = sphi 0, %s86
    %s89 = sphi 0, %s88
    %s103 = sphi 0, %s89
    %s109 = sphi 0, %s111
    %s112 = sphi 0, %s109
    %s113 = sphi 0, %s112
    %s129 = sphi 0, %s113
  $region4: #{up_conv_forward.3} parent=0 // loop_header_branch
    %13 = sbr.rel (%p11) target = $region8
  $region5: #{up_conv_forward.3} parent=0 // loop_body
    %s15 = ssub.s32 %s10, 1
    %s16 = ssub.s32 %s10, 2
    %s17 = sadd.s32 %s10, 1
    %s18 = ssub.s32 %s10, %s17
    %p19 = scmp.eq.s32.totalorder %s18, 0
    %s21 = sadd.s32 %s20, 1
    %s22 = scalar_select %p19, %s20, %s21
    %p25 = pneg %p19
    %p26 = scmp.eq.s32.totalorder %s10, 1
    %p27 = por %p25, %p26
    %p28 = scmp.ne.s32.totalorder %s20, %s23
    %p29 = scmp.eq.s32.totalorder %s10, 0
    %p30 = por %p28, %p29
    %p31 = scmp.ne.s32.totalorder %s20, %s23
    %p32 = scmp.eq.s32.totalorder %s15, 1
    %p33 = por %p31, %p32
    %p34 = scmp.ne.s32.totalorder %s23, %s24
    %p35 = scmp.eq.s32.totalorder %s15, 0
    %p36 = por %p34, %p35
    %p37 = scmp.ne.s32.totalorder %s23, %s24
    %p38 = scmp.eq.s32.totalorder %s16, 1
    %p39 = por %p37, %p38
    %p41 = scmp.ne.s32.totalorder %s24, %s40
    %p42 = scmp.eq.s32.totalorder %s16, 0
    %p43 = por %p41, %p42
    %s45 = sadd.s32 %s44, 1
    %p48 = scmp.eq.s32.totalorder %s10, 1
    %p49 = scmp.ne.s32.totalorder %s44, %s46
    %p50 = scmp.eq.s32.totalorder %s10, 0
    %p51 = por %p49, %p50
    %p52 = scmp.ne.s32.totalorder %s44, %s46
    %p53 = scmp.eq.s32.totalorder %s15, 1
    %p54 = por %p52, %p53
    %p55 = scmp.ne.s32.totalorder %s46, %s47
    %p56 = scmp.eq.s32.totalorder %s15, 0
    %p57 = por %p55, %p56
    %p58 = scmp.ne.s32.totalorder %s46, %s47
    %p59 = scmp.eq.s32.totalorder %s16, 1
    %p60 = por %p58, %p59
    %p62 = scmp.ne.s32.totalorder %s47, %s61
    %p63 = scmp.eq.s32.totalorder %s16, 0
    %p64 = por %p62, %p63
    %s66 = sadd.s32 %s65, 1
    %p69 = scmp.eq.s32.totalorder %s10, 1
    %p70 = scmp.ne.s32.totalorder %s65, %s67
    %p71 = scmp.eq.s32.totalorder %s10, 0
    %p72 = por %p70, %p71
    %p73 = scmp.ne.s32.totalorder %s65, %s67
    %p74 = scmp.eq.s32.totalorder %s15, 1
    %p75 = por %p73, %p74
    %p76 = scmp.ne.s32.totalorder %s67, %s68
    %p77 = scmp.eq.s32.totalorder %s15, 0
    %p78 = por %p76, %p77
    %p79 = scmp.ne.s32.totalorder %s67, %s68
    %p80 = scmp.eq.s32.totalorder %s16, 1
    %p81 = por %p79, %p80
    %p83 = scmp.ne.s32.totalorder %s68, %s82
    %p84 = scmp.eq.s32.totalorder %s16, 0
    %p85 = por %p83, %p84
    %s87 = sadd.s32 %s86, 1
    %p90 = scmp.eq.s32.totalorder %s10, 1
    %p91 = scmp.ne.s32.totalorder %s86, %s88
    %p92 = scmp.eq.s32.totalorder %s10, 0
    %p93 = por %p91, %p92
    %p94 = scmp.ne.s32.totalorder %s86, %s88
    %p95 = scmp.eq.s32.totalorder %s15, 1
    %p96 = por %p94, %p95
    %p97 = scmp.ne.s32.totalorder %s88, %s89
    %p98 = scmp.eq.s32.totalorder %s15, 0
    %p99 = por %p97, %p98
    %p100 = scmp.ne.s32.totalorder %s88, %s89
    %p101 = scmp.eq.s32.totalorder %s16, 1
    %p102 = por %p100, %p101
    %p104 = scmp.ne.s32.totalorder %s89, %s103
    %p105 = scmp.eq.s32.totalorder %s16, 0
    %p106 = por %p104, %p105
    %s107 = ssub.s32 %s10, %s17
    %p108 = scmp.eq.s32.totalorder %s107, 0
    %s110 = sadd.s32 %s109, 1
    %s111 = scalar_select %p108, %s109, %s110
    %p114 = pneg %p108
    %p115 = scmp.eq.s32.totalorder %s10, 1
    %p116 = por %p114, %p115
    %p117 = scmp.ne.s32.totalorder %s109, %s112
    %p118 = scmp.eq.s32.totalorder %s10, 0
    %p119 = por %p117, %p118
    %p120 = scmp.ne.s32.totalorder %s109, %s112
    %p121 = scmp.eq.s32.totalorder %s15, 1
    %p122 = por %p120, %p121
    %p123 = scmp.ne.s32.totalorder %s112, %s113
    %p124 = scmp.eq.s32.totalorder %s15, 0
    %p125 = por %p123, %p124
    %p126 = scmp.ne.s32.totalorder %s112, %s113
    %p127 = scmp.eq.s32.totalorder %s16, 1
    %p128 = por %p126, %p127
    %p130 = scmp.ne.s32.totalorder %s113, %s129
    %p131 = scmp.eq.s32.totalorder %s16, 0
    %p132 = por %p130, %p131
    %p133 = scmp.le.s32.totalorder 1, %s10
    %p134 = scmp.lt.s32.totalorder %s10, 3
    %p135 = pnand %p133, %p134
    %p136 = pneg %p135
    // Predicated region
    $region9: #{up_conv_forward.3} parent=5 // pred_check
      _
    $region10: #{up_conv_forward.3} parent=5 // pred_check_branch
      %138 = sbr.rel (%p135) target = $region12
    $region11: #{up_conv_forward.3} parent=5 // pred_region
      %s139 = ssub.s32 %s10, 1
      // Predicated region
      $region13: #{up_conv_forward.3} parent=11 // pred_check
        %p140 = pneg %p57
      $region14: #{up_conv_forward.3} parent=11 // pred_check_branch
        %142 = sbr.rel (%p140) target = $region16
      $region15: #{up_conv_forward.3} parent=11 // pred_region
        _
      $region16: #{up_conv_forward.3} parent=11 // pred_fallthru
        _
      // Predicated region
      $region17: #{up_conv_forward.3} parent=11 // pred_check
        %p143 = pneg %p78
      $region18: #{up_conv_forward.3} parent=11 // pred_check_branch
        %145 = sbr.rel (%p143) target = $region20
      $region19: #{up_conv_forward.3} parent=11 // pred_region
        _
      $region20: #{up_conv_forward.3} parent=11 // pred_fallthru
        _
      // Predicated region
      $region21: #{up_conv_forward.3} parent=11 // pred_check
        %p146 = pneg %p99
      $region22: #{up_conv_forward.3} parent=11 // pred_check_branch
        %148 = sbr.rel (%p146) target = $region24
      $region23: #{up_conv_forward.3} parent=11 // pred_region
        _
      $region24: #{up_conv_forward.3} parent=11 // pred_fallthru
        _
    $region12: #{up_conv_forward.3} parent=5 // pred_fallthru
      _
    %p149 = scmp.lt.s32.totalorder %s10, 2
    // Predicated region
    $region25: #{up_conv_forward.3} parent=5 // pred_check
      %p150 = pneg %p149
    $region26: #{up_conv_forward.3} parent=5 // pred_check_branch
      %152 = sbr.rel (%p150) target = $region28
    $region27: #{up_conv_forward.3} parent=5 // pred_region
      // Predicated region
      $region29: #{up_conv_forward.3} parent=27 // pred_check
        %p153 = pneg %p30
      $region30: #{up_conv_forward.3} parent=27 // pred_check_branch
        %155 = sbr.rel (%p153) target = $region32
      $region31: #{up_conv_forward.3} parent=27 // pred_region
        %s156 = smul.u32 32, %s10
        %p157 = scmp.lt.s32.totalorder %s156, 63
        %s158 = scalar_select %p157, %s156, 63
        %s159 = smul.addr %s158, 4
        %s160 = scalar_lea.vmem %s0, %s159
        %s161 = smul.u32 32, %s10
      $region32: #{up_conv_forward.3} parent=27 // pred_fallthru
        _
    $region28: #{up_conv_forward.3} parent=5 // pred_fallthru
      _
    %p162 = scmp.le.s32.totalorder 1, %s10
    %p163 = scmp.lt.s32.totalorder %s10, 3
    %p164 = pnand %p162, %p163
    %p165 = pneg %p164
    // Predicated region
    $region33: #{up_conv_forward.3} parent=5 // pred_check
      _
    $region34: #{up_conv_forward.3} parent=5 // pred_check_branch
      %167 = sbr.rel (%p164) target = $region36
    $region35: #{up_conv_forward.3} parent=5 // pred_region
      %s168 = ssub.s32 %s10, 1
      %s169 = smul.u32 32, %s15
      %p170 = scmp.lt.s32.totalorder %s169, 63
      %s171 = scalar_select %p170, %s169, 63
      %s172 = smul.addr %s171, 4
      %s173 = scalar_lea.vmem %s0, %s172
      %p174 = pneg %p36
      %p175 = pneg %p33
      %p176 = pneg %p57
      %p177 = pneg %p54
      %p178 = pneg %p78
      %p179 = pneg %p75
      %p180 = pneg %p99
      %p181 = pneg %p96
      %p182 = pneg %p125
      %p183 = pneg %p122
      %s184 = smul.u32 32, %s15
      %p185 = scmp.lt.s32.totalorder %s184, 63
      %s186 = scalar_select %p185, %s184, 63
      %s187 = smul.addr %s186, 8
      %s188 = scalar_lea.vmem %s4, %s187
      %s189 = smul.u32 32, %s15
      %p190 = scmp.lt.s32.totalorder %s189, 63
      %s191 = scalar_select %p190, %s189, 63
      %s192 = smul.addr %s191, 4
      %s193 = scalar_lea.vmem %s0, %s192
      %s194 = smul.u32 32, %s15
      %s195 = smul.u32 32, %s15
      %p196 = scmp.lt.s32.totalorder %s195, 63
      %s197 = scalar_select %p196, %s195, 63
      %s198 = smul.addr %s197, 8
      %s199 = scalar_lea.vmem %s4, %s198
      %s200 = smul.u32 32, %s15
      %v202 = vld [vmem:[%s193] sm:$0xf]
      %v203 = vld [vmem:[%s193 + $0x4] sm:$0xf]
      %v204 = vld [vmem:[%s193 + $0x8] sm:$0xf]
      %v205 = vld [vmem:[%s193 + $0xc] sm:$0xf]
      %v206 = vld [vmem:[%s193 + $0x10] sm:$0xf]
      %v207 = vld [vmem:[%s193 + $0x14] sm:$0xf]
      %v208 = vld [vmem:[%s193 + $0x18] sm:$0xf]
      %v209 = vld [vmem:[%s193 + $0x1c] sm:$0xf]
      %v210 = vld [vmem:[%s193 + $0x20] sm:$0xf]
      %v211 = vld [vmem:[%s193 + $0x24] sm:$0xf]
      %v212 = vld [vmem:[%s193 + $0x28] sm:$0xf]
      %v213 = vld [vmem:[%s193 + $0x2c] sm:$0xf]
      %v214 = vld [vmem:[%s193 + $0x30] sm:$0xf]
      %v215 = vld [vmem:[%s193 + $0x34] sm:$0xf]
      %v216 = vld [vmem:[%s193 + $0x38] sm:$0xf]
      %v217 = vld [vmem:[%s193 + $0x3c] sm:$0xf]
      %v218 = vld [vmem:[%s193 + $0x40] sm:$0xf]
      %v219 = vld [vmem:[%s193 + $0x44] sm:$0xf]
      %v220 = vld [vmem:[%s193 + $0x48] sm:$0xf]
      %v221 = vld [vmem:[%s193 + $0x4c] sm:$0xf]
      %v222 = vld [vmem:[%s193 + $0x50] sm:$0xf]
      %v223 = vld [vmem:[%s193 + $0x54] sm:$0xf]
      %v224 = vld [vmem:[%s193 + $0x58] sm:$0xf]
      %v225 = vld [vmem:[%s193 + $0x5c] sm:$0xf]
      %v226 = vld [vmem:[%s193 + $0x60] sm:$0xf]
      %v227 = vld [vmem:[%s193 + $0x64] sm:$0xf]
      %v228 = vld [vmem:[%s193 + $0x68] sm:$0xf]
      %v229 = vld [vmem:[%s193 + $0x6c] sm:$0xf]
      %v230 = vld [vmem:[%s193 + $0x70] sm:$0xf]
      %v231 = vld [vmem:[%s193 + $0x74] sm:$0xf]
      %v232 = vld [vmem:[%s193 + $0x78] sm:$0xf]
      %v233 = vld [vmem:[%s193 + $0x7c] sm:$0xf]
      %v234 = vld [vmem:[%s1] sm:$0xf]
      %v235 = vld [vmem:[%s1 + $0x4] sm:$0xf]
      %v236 = vld [vmem:[%s1 + $0x8] sm:$0xf]
      %v237 = vld [vmem:[%s1 + $0xc] sm:$0xf]
      %v238 = vld [vmem:[%s1 + $0x10] sm:$0x3]
      %v271 = vunpack.c.l.b16 %v202
      %v272 = vunpack.c.l.b16 %v203
      %v273 = vunpack.c.l.b16 %v204
      %v274 = vunpack.c.l.b16 %v205
      %v275 = vunpack.c.l.b16 %v206
      %v276 = vunpack.c.l.b16 %v207
      %v277 = vunpack.c.l.b16 %v208
      %v278 = vunpack.c.l.b16 %v209
      %v279 = vunpack.c.l.b16 %v210
      %v280 = vunpack.c.l.b16 %v211
      %v281 = vunpack.c.l.b16 %v212
      %v282 = vunpack.c.l.b16 %v213
      %v283 = vunpack.c.l.b16 %v214
      %v284 = vunpack.c.l.b16 %v215
      %v285 = vunpack.c.l.b16 %v216
      %v286 = vunpack.c.l.b16 %v217
      %v287 = vunpack.c.l.b16 %v218
      %v288 = vunpack.c.l.b16 %v219
      %v289 = vunpack.c.l.b16 %v220
      %v290 = vunpack.c.l.b16 %v221
      %v291 = vunpack.c.l.b16 %v222
      %v292 = vunpack.c.l.b16 %v223
      %v293 = vunpack.c.l.b16 %v224
      %v294 = vunpack.c.l.b16 %v225
      %v295 = vunpack.c.l.b16 %v226
      %v296 = vunpack.c.l.b16 %v227
      %v297 = vunpack.c.l.b16 %v228
      %v298 = vunpack.c.l.b16 %v229
      %v299 = vunpack.c.l.b16 %v230
      %v300 = vunpack.c.l.b16 %v231
      %v301 = vunpack.c.l.b16 %v232
      %v302 = vunpack.c.l.b16 %v233
      %v303 = vpack.c.b16 %v272, %v271
      %v304 = vpack.c.b16 %v274, %v273
      %v305 = vpack.c.b16 %v276, %v275
      %v306 = vpack.c.b16 %v278, %v277
      %v307 = vpack.c.b16 %v280, %v279
      %v308 = vpack.c.b16 %v282, %v281
      %v309 = vpack.c.b16 %v284, %v283
      %v310 = vpack.c.b16 %v286, %v285
      %v311 = vpack.c.b16 %v288, %v287
      %v312 = vpack.c.b16 %v290, %v289
      %v313 = vpack.c.b16 %v292, %v291
      %v314 = vpack.c.b16 %v294, %v293
      %v315 = vpack.c.b16 %v296, %v295
      %v316 = vpack.c.b16 %v298, %v297
      %v317 = vpack.c.b16 %v300, %v299
      %v318 = vpack.c.b16 %v302, %v301
      %v324 = vunpack.c.l.b16 %v234
      %v325 = vunpack.c.l.b16 %v235
      %v326 = vunpack.c.l.b16 %v236
      %v327 = vunpack.c.l.b16 %v237
      %v328 = vunpack.c.l.b16 %v238
      %v329 = vpack.c.b16 %v325, %v324
      %v330 = vpack.c.b16 %v327, %v326
      %v331 = vpack.c.b16 %v328, %v328
      %vm334 = vcmask 293888
      %v336 = vsel %vm334, %v303, 0
      %v339 = vsel %vm334, %v304, 0
      %v342 = vsel %vm334, %v305, 0
      %v345 = vsel %vm334, %v306, 0
      %v348 = vsel %vm334, %v307, 0
      %v351 = vsel %vm334, %v308, 0
      %v354 = vsel %vm334, %v309, 0
      %v357 = vsel %vm334, %v310, 0
      %v360 = vsel %vm334, %v311, 0
      %v363 = vsel %vm334, %v312, 0
      %v366 = vsel %vm334, %v313, 0
      %v369 = vsel %vm334, %v314, 0
      %v372 = vsel %vm334, %v315, 0
      %v375 = vsel %vm334, %v316, 0
      %v378 = vsel %vm334, %v317, 0
      %v381 = vsel %vm334, %v318, 0
      %vm383 = vcmask 1041408
      %v385 = vsel %vm383, %v331, 0
      %387 = vmatpush.bf16.msra.mxu0 0
      %388 = vmatpush.bf16.msra.mxu0 0
      %389 = vmatpush.bf16.msra.mxu0 0
      %390 = vmatpush.bf16.msra.mxu0 0
      %391 = vmatpush.bf16.msra.mxu0 0
      %392 = vmatpush.bf16.msra.mxu0 %v385
      %393 = vmatpush.bf16.msra.mxu0 %v330
      %394 = vmatpush.bf16.msra.mxu0 %v329
      %395 = vmatmul.bf16.gmra.mxu0 %v336
      %v396 = vpop.f32.mrf.mxu0
      %v397 = vadd.f32 0.0, %v396
      %v398 = vpop.f32.mrf.mxu0
      %v399 = vadd.f32 0.0, %v398
      %400 = vmatmul.bf16.gmra.mxu0 %v339
      %v401 = vpop.f32.mrf.mxu0
      %v402 = vadd.f32 0.0, %v401
      %v403 = vpop.f32.mrf.mxu0
      %v404 = vadd.f32 0.0, %v403
      %405 = vmatmul.bf16.gmra.mxu0 %v342
      %v406 = vpop.f32.mrf.mxu0
      %v407 = vadd.f32 0.0, %v406
      %v408 = vpop.f32.mrf.mxu0
      %v409 = vadd.f32 0.0, %v408
      %410 = vmatmul.bf16.gmra.mxu0 %v345
      %v411 = vpop.f32.mrf.mxu0
      %v412 = vadd.f32 0.0, %v411
      %v413 = vpop.f32.mrf.mxu0
      %v414 = vadd.f32 0.0, %v413
      %415 = vmatmul.bf16.gmra.mxu0 %v348
      %v416 = vpop.f32.mrf.mxu0
      %v417 = vadd.f32 0.0, %v416
      %v418 = vpop.f32.mrf.mxu0
      %v419 = vadd.f32 0.0, %v418
      %420 = vmatmul.bf16.gmra.mxu0 %v351
      %v421 = vpop.f32.mrf.mxu0
      %v422 = vadd.f32 0.0, %v421
      %v423 = vpop.f32.mrf.mxu0
      %v424 = vadd.f32 0.0, %v423
      %425 = vmatmul.bf16.gmra.mxu0 %v354
      %v426 = vpop.f32.mrf.mxu0
      %v427 = vadd.f32 0.0, %v426
      %v428 = vpop.f32.mrf.mxu0
      %v429 = vadd.f32 0.0, %v428
      %430 = vmatmul.bf16.gmra.mxu0 %v357
      %v431 = vpop.f32.mrf.mxu0
      %v432 = vadd.f32 0.0, %v431
      %v433 = vpop.f32.mrf.mxu0
      %v434 = vadd.f32 0.0, %v433
      %435 = vmatmul.bf16.gmra.mxu0 %v360
      %v436 = vpop.f32.mrf.mxu0
      %v437 = vadd.f32 0.0, %v436
      %v438 = vpop.f32.mrf.mxu0
      %v439 = vadd.f32 0.0, %v438
      %440 = vmatmul.bf16.gmra.mxu0 %v363
      %v441 = vpop.f32.mrf.mxu0
      %v442 = vadd.f32 0.0, %v441
      %v443 = vpop.f32.mrf.mxu0
      %v444 = vadd.f32 0.0, %v443
      %445 = vmatmul.bf16.gmra.mxu0 %v366
      %v446 = vpop.f32.mrf.mxu0
      %v447 = vadd.f32 0.0, %v446
      %v448 = vpop.f32.mrf.mxu0
      %v449 = vadd.f32 0.0, %v448
      %450 = vmatmul.bf16.gmra.mxu0 %v369
      %v451 = vpop.f32.mrf.mxu0
      %v452 = vadd.f32 0.0, %v451
      %v453 = vpop.f32.mrf.mxu0
      %v454 = vadd.f32 0.0, %v453
      %455 = vmatmul.bf16.gmra.mxu0 %v372
      %v456 = vpop.f32.mrf.mxu0
      %v457 = vadd.f32 0.0, %v456
      %v458 = vpop.f32.mrf.mxu0
      %v459 = vadd.f32 0.0, %v458
      %460 = vmatmul.bf16.gmra.mxu0 %v375
      %v461 = vpop.f32.mrf.mxu0
      %v462 = vadd.f32 0.0, %v461
      %v463 = vpop.f32.mrf.mxu0
      %v464 = vadd.f32 0.0, %v463
      %465 = vmatmul.bf16.gmra.mxu0 %v378
      %v466 = vpop.f32.mrf.mxu0
      %v467 = vadd.f32 0.0, %v466
      %v468 = vpop.f32.mrf.mxu0
      %v469 = vadd.f32 0.0, %v468
      %470 = vmatmul.bf16.gmra.mxu0 %v381
      %v471 = vpop.f32.mrf.mxu0
      %v472 = vadd.f32 0.0, %v471
      %v473 = vpop.f32.mrf.mxu0
      %v474 = vadd.f32 0.0, %v473
      %475 = vdwg.mxu0
      %v476 = vld [vmem:[%s2] sm:$0x1]
      %v478 = vperm.slane %v476, 0
      %v480 = vmul.f32 %v397, %v478
      %v481 = vmul.f32 %v399, %v478
      %v482 = vmul.f32 %v402, %v478
      %v483 = vmul.f32 %v404, %v478
      %v484 = vmul.f32 %v407, %v478
      %v485 = vmul.f32 %v409, %v478
      %v486 = vmul.f32 %v412, %v478
      %v487 = vmul.f32 %v414, %v478
      %v488 = vmul.f32 %v417, %v478
      %v489 = vmul.f32 %v419, %v478
      %v490 = vmul.f32 %v422, %v478
      %v491 = vmul.f32 %v424, %v478
      %v492 = vmul.f32 %v427, %v478
      %v493 = vmul.f32 %v429, %v478
      %v494 = vmul.f32 %v432, %v478
      %v495 = vmul.f32 %v434, %v478
      %v496 = vmul.f32 %v437, %v478
      %v497 = vmul.f32 %v439, %v478
      %v498 = vmul.f32 %v442, %v478
      %v499 = vmul.f32 %v444, %v478
      %v500 = vmul.f32 %v447, %v478
      %v501 = vmul.f32 %v449, %v478
      %v502 = vmul.f32 %v452, %v478
      %v503 = vmul.f32 %v454, %v478
      %v504 = vmul.f32 %v457, %v478
      %v505 = vmul.f32 %v459, %v478
      %v506 = vmul.f32 %v462, %v478
      %v507 = vmul.f32 %v464, %v478
      %v508 = vmul.f32 %v467, %v478
      %v509 = vmul.f32 %v469, %v478
      %v510 = vmul.f32 %v472, %v478
      %v511 = vmul.f32 %v474, %v478
      %v512 = vld [vmem:[%s3] sm:$0x1]
      %v514 = vperm.slane %v512, 0
      %v516 = vadd.f32 %v480, %v514
      %v517 = vadd.f32 %v481, %v514
      %v518 = vadd.f32 %v482, %v514
      %v519 = vadd.f32 %v483, %v514
      %v520 = vadd.f32 %v484, %v514
      %v521 = vadd.f32 %v485, %v514
      %v522 = vadd.f32 %v486, %v514
      %v523 = vadd.f32 %v487, %v514
      %v524 = vadd.f32 %v488, %v514
      %v525 = vadd.f32 %v489, %v514
      %v526 = vadd.f32 %v490, %v514
      %v527 = vadd.f32 %v491, %v514
      %v528 = vadd.f32 %v492, %v514
      %v529 = vadd.f32 %v493, %v514
      %v530 = vadd.f32 %v494, %v514
      %v531 = vadd.f32 %v495, %v514
      %v532 = vadd.f32 %v496, %v514
      %v533 = vadd.f32 %v497, %v514
      %v534 = vadd.f32 %v498, %v514
      %v535 = vadd.f32 %v499, %v514
      %v536 = vadd.f32 %v500, %v514
      %v537 = vadd.f32 %v501, %v514
      %v538 = vadd.f32 %v502, %v514
      %v539 = vadd.f32 %v503, %v514
      %v540 = vadd.f32 %v504, %v514
      %v541 = vadd.f32 %v505, %v514
      %v542 = vadd.f32 %v506, %v514
      %v543 = vadd.f32 %v507, %v514
      %v544 = vadd.f32 %v508, %v514
      %v545 = vadd.f32 %v509, %v514
      %v546 = vadd.f32 %v510, %v514
      %v547 = vadd.f32 %v511, %v514
      %v548 = vmax.f32 %v516, 0.0
      %v549 = vmax.f32 %v517, 0.0
      %v550 = vmax.f32 %v518, 0.0
      %v551 = vmax.f32 %v519, 0.0
      %v552 = vmax.f32 %v520, 0.0
      %v553 = vmax.f32 %v521, 0.0
      %v554 = vmax.f32 %v522, 0.0
      %v555 = vmax.f32 %v523, 0.0
      %v556 = vmax.f32 %v524, 0.0
      %v557 = vmax.f32 %v525, 0.0
      %v558 = vmax.f32 %v526, 0.0
      %v559 = vmax.f32 %v527, 0.0
      %v560 = vmax.f32 %v528, 0.0
      %v561 = vmax.f32 %v529, 0.0
      %v562 = vmax.f32 %v530, 0.0
      %v563 = vmax.f32 %v531, 0.0
      %v564 = vmax.f32 %v532, 0.0
      %v565 = vmax.f32 %v533, 0.0
      %v566 = vmax.f32 %v534, 0.0
      %v567 = vmax.f32 %v535, 0.0
      %v568 = vmax.f32 %v536, 0.0
      %v569 = vmax.f32 %v537, 0.0
      %v570 = vmax.f32 %v538, 0.0
      %v571 = vmax.f32 %v539, 0.0
      %v572 = vmax.f32 %v540, 0.0
      %v573 = vmax.f32 %v541, 0.0
      %v574 = vmax.f32 %v542, 0.0
      %v575 = vmax.f32 %v543, 0.0
      %v576 = vmax.f32 %v544, 0.0
      %v577 = vmax.f32 %v545, 0.0
      %v578 = vmax.f32 %v546, 0.0
      %v579 = vmax.f32 %v547, 0.0
      %580 = vst [vmem:[%s199] sm:$0xff] %v548
      %581 = vst [vmem:[%s199 + $0x8] sm:$0xff] %v549
      %582 = vst [vmem:[%s199 + $0x10] sm:$0xff] %v550
      %583 = vst [vmem:[%s199 + $0x18] sm:$0xff] %v551
      %584 = vst [vmem:[%s199 + $0x20] sm:$0xff] %v552
      %585 = vst [vmem:[%s199 + $0x28] sm:$0xff] %v553
      %586 = vst [vmem:[%s199 + $0x30] sm:$0xff] %v554
      %587 = vst [vmem:[%s199 + $0x38] sm:$0xff] %v555
      %588 = vst [vmem:[%s199 + $0x40] sm:$0xff] %v556
      %589 = vst [vmem:[%s199 + $0x48] sm:$0xff] %v557
      %590 = vst [vmem:[%s199 + $0x50] sm:$0xff] %v558
      %591 = vst [vmem:[%s199 + $0x58] sm:$0xff] %v559
      %592 = vst [vmem:[%s199 + $0x60] sm:$0xff] %v560
      %593 = vst [vmem:[%s199 + $0x68] sm:$0xff] %v561
      %594 = vst [vmem:[%s199 + $0x70] sm:$0xff] %v562
      %595 = vst [vmem:[%s199 + $0x78] sm:$0xff] %v563
      %596 = vst [vmem:[%s199 + $0x80] sm:$0xff] %v564
      %597 = vst [vmem:[%s199 + $0x88] sm:$0xff] %v565
      %598 = vst [vmem:[%s199 + $0x90] sm:$0xff] %v566
      %599 = vst [vmem:[%s199 + $0x98] sm:$0xff] %v567
      %600 = vst [vmem:[%s199 + $0xa0] sm:$0xff] %v568
      %601 = vst [vmem:[%s199 + $0xa8] sm:$0xff] %v569
      %602 = vst [vmem:[%s199 + $0xb0] sm:$0xff] %v570
      %603 = vst [vmem:[%s199 + $0xb8] sm:$0xff] %v571
      %604 = vst [vmem:[%s199 + $0xc0] sm:$0xff] %v572
      %605 = vst [vmem:[%s199 + $0xc8] sm:$0xff] %v573
      %606 = vst [vmem:[%s199 + $0xd0] sm:$0xff] %v574
      %607 = vst [vmem:[%s199 + $0xd8] sm:$0xff] %v575
      %608 = vst [vmem:[%s199 + $0xe0] sm:$0xff] %v576
      %609 = vst [vmem:[%s199 + $0xe8] sm:$0xff] %v577
      %610 = vst [vmem:[%s199 + $0xf0] sm:$0xff] %v578
      %611 = vst [vmem:[%s199 + $0xf8] sm:$0xff] %v579
      %s612 = smul.u32 32, %s15
      %p613 = scmp.lt.s32.totalorder %s612, 63
      %s614 = scalar_select %p613, %s612, 63
      %s615 = smul.addr %s614, 8
      %s616 = scalar_lea.vmem %s4, %s615
      // Predicated region
      $region37: #{up_conv_forward.3} parent=35 // pred_check
        %p617 = pneg %p122
      $region38: #{up_conv_forward.3} parent=35 // pred_check_branch
        %619 = sbr.rel (%p617) target = $region40
      $region39: #{up_conv_forward.3} parent=35 // pred_region
        %s620 = smul.u32 32, %s15
      $region40: #{up_conv_forward.3} parent=35 // pred_fallthru
        _
    $region36: #{up_conv_forward.3} parent=5 // pred_fallthru
      _
    %p621 = scmp.le.s32.totalorder 2, %s10
    // Predicated region
    $region41: #{up_conv_forward.3} parent=5 // pred_check
      %p622 = pneg %p621
    $region42: #{up_conv_forward.3} parent=5 // pred_check_branch
      %624 = sbr.rel (%p622) target = $region44
    $region43: #{up_conv_forward.3} parent=5 // pred_region
      %s625 = ssub.s32 %s10, 2
      // Predicated region
      $region45: #{up_conv_forward.3} parent=43 // pred_check
        %p626 = pneg %p128
      $region46: #{up_conv_forward.3} parent=43 // pred_check_branch
        %628 = sbr.rel (%p626) target = $region48
      $region47: #{up_conv_forward.3} parent=43 // pred_region
        %s629 = smul.u32 32, %s16
        %p630 = scmp.lt.s32.totalorder %s629, 63
        %s631 = scalar_select %p630, %s629, 63
        %s632 = smul.addr %s631, 8
        %s633 = scalar_lea.vmem %s4, %s632
      $region48: #{up_conv_forward.3} parent=43 // pred_fallthru
        _
    $region44: #{up_conv_forward.3} parent=5 // pred_fallthru
      _
  $region6: #{up_conv_forward.3} parent=0 // loop_footer
    %s14 = sadd.s32 1, %s10
  $region7: #{up_conv_forward.3} parent=0 // loop_footer_branch
    %9 = sbr.rel target = $region3
  $region8: #{up_conv_forward.3} parent=0 // loop_exit
    _

</llo_original>
